<compile_context>
chip_gen: v7x
topology: tpu7x:2x2x1
jax: 0.10.0
libtpu: 0.0.40
codegen_flags: <defaults>
</compile_context>

<pallas_src>
import functools

import jax
import jax.numpy as jnp
import numpy as np
from jax import lax
from jax.experimental import pallas as pl
from jax.experimental.pallas import tpu as pltpu

EPS_IN = 1e-3   # InstanceNorm2d eps from the module
EPS_BN = 1e-5   # BatchNorm2d default eps


def _round_up(v, m):
    return (v + m - 1) // m * m


def _row_stats(x, inv_n):
    """Per-row mean and rsqrt(var + eps) over the valid points of a (C, Np) tile.

    `x` must be zero in padded columns.  Fused stats pass: sum and sum-of-squares
    are issued together and var = E[x^2] - mu^2, halving the XLU reduction work
    vs. a naive two-pass mean/var.
    """
    s = jnp.sum(x, axis=1, keepdims=True)
    sq = jnp.sum(x * x, axis=1, keepdims=True)
    mu = s * inv_n
    var = jnp.maximum(sq * inv_n - mu * mu, 0.0)
    return mu, lax.rsqrt(var + EPS_IN)


def oafilter_kernel(x_ref, w1_ref, w2_ref, w3_ref, pc_ref, pp_ref, o_ref, *,
                    n_valid):
    x = x_ref[...]                                   # (Cp, Np) f32, zero-padded
    _, n_pad = x.shape
    inv_n = 1.0 / float(n_valid)

    # Packed per-channel params: (Cp, 8) cols = [b1, s1, t1, b3, s3, t3, 0, 0]
    pc = pc_ref[...]
    b1, s1, t1 = pc[:, 0:1], pc[:, 1:2], pc[:, 2:3]
    b3, s3, t3 = pc[:, 3:4], pc[:, 4:5], pc[:, 5:6]
    # Packed per-point params (lane-dense): (8, Np) rows = [s2, t2, b2, 0...]
    pp = pp_ref[...]
    s2, t2, b2 = pp[0:1, :], pp[1:2, :], pp[2:3, :]

    # ---- conv1: InstanceNorm(C) -> BN(C) -> ReLU -> Conv1x1(C->C) ----------
    # InstanceNorm and the folded-BN affine collapse into one per-channel FMA:
    #   y1 = relu(a1 * x + c1),  a1 = s1 * rsqrt(var+eps),  c1 = t1 - a1 * mu.
    mu1, r1 = _row_stats(x, inv_n)
    a1 = s1 * r1
    c1 = t1 - a1 * mu1
    y1 = jnp.maximum(a1 * x + c1, 0.0)
    h1 = jnp.dot(w1_ref[...], y1.astype(jnp.bfloat16),
                 preferred_element_type=jnp.float32) + b1        # (Cp, Np)

    # ---- conv2 (on the PyTorch-transposed tensor) without transposing ------
    # BN(points) / bias act along the lane (point) axis; the 1x1 conv over the
    # point axis becomes a contraction of the LAST axis of y2 with the last
    # axis of w2:  h2[c, m] = sum_n y2[c, n] * w2[m, n] + b2[m].
    # (s2, t2 are zero in padded columns, so padded-column garbage in h1 is
    #  killed before entering the contraction.)
    y2 = jnp.maximum(s2 * h1 + t2, 0.0)
    h2 = lax.dot_general(y2.astype(jnp.bfloat16), w2_ref[...],
                         (((1,), (1,)), ((), ())),
                         preferred_element_type=jnp.float32) + b2
    u = h1 + h2                                                  # residual, (Cp, Np)

    # ---- conv3: InstanceNorm(C) -> BN(C) -> ReLU -> Conv1x1(C->C) ----------
    if n_pad != n_valid:
        # Padded point columns of h1 are garbage; zero them so the norm stats
        # (computed with the true-N divisor) stay exact.
        col_mask = lax.broadcasted_iota(jnp.int32, (1, n_pad), 1) < n_valid
        u = jnp.where(col_mask, u, 0.0)
    mu3, r3 = _row_stats(u, inv_n)
    a3 = s3 * r3
    c3 = t3 - a3 * mu3
    y3 = jnp.maximum(a3 * u + c3, 0.0)
    h3 = jnp.dot(w3_ref[...], y3.astype(jnp.bfloat16),
                 preferred_element_type=jnp.float32) + b3        # (Cp, Np)

    # ---- final residual: out_channels == channels -> shot_cut is None ------
    o_ref[...] = h3 + x


def _invariant_spec(shape):
    # Grid-invariant operand (constant index_map): the block index never
    # changes across grid steps, so Pallas fetches it once and reuses it.
    nd = len(shape)
    return pl.BlockSpec(shape, lambda b: (0,) * nd)


def _vmem_limit_bytes(c_pad, n_pad):
    io = 2 * 2 * c_pad * n_pad * 4                        # x/out blocks, double-buffered f32
    wts = 2 * (2 * c_pad * c_pad + n_pad * n_pad) * 2     # bf16 weights (allow 2x buffering)
    small = 2 * (c_pad * 8 + 8 * n_pad) * 4               # packed params
    est = 2 * (io + wts + small) + (4 << 20)              # 2x headroom for temporaries
    # Keep within v7x's 64 MiB physical VMEM; also lifts v5e's 16 MiB default.
    return int(min(max(est, 32 << 20), 64 << 20))


def oafilter_forward(x_nchw, params):
    """x_nchw: (B, C, N, 1) float32 -> (B, C, N, 1) float32."""
    B, C, N, one = x_nchw.shape
    assert one == 1
    c_pad = max(_round_up(C, 8), 8)
    n_pad = max(_round_up(N, 128), 128)

    x = jnp.pad(x_nchw[..., 0], ((0, 0), (0, c_pad - C), (0, n_pad - N)))

    def pad_w(w, r, c):
        return jnp.pad(w, ((0, r - w.shape[0]), (0, c - w.shape[1])))

    def pad_v(v, n):
        return jnp.pad(v.astype(jnp.float32), ((0, n - v.shape[0]),))

    w1 = pad_w(params["w1"], c_pad, c_pad)          # bf16
    w2 = pad_w(params["w2"], n_pad, n_pad)          # bf16
    w3 = pad_w(params["w3"], c_pad, c_pad)          # bf16

    zc = jnp.zeros((c_pad,), jnp.float32)
    zn = jnp.zeros((n_pad,), jnp.float32)
    # Per-channel packed params: (Cp, 8) = [b1, s1, t1, b3, s3, t3, 0, 0]
    pc = jnp.stack([pad_v(params["b1"], c_pad), pad_v(params["s1"], c_pad),
                    pad_v(params["t1"], c_pad), pad_v(params["b3"], c_pad),
                    pad_v(params["s3"], c_pad), pad_v(params["t3"], c_pad),
                    zc, zc], axis=1)
    # Per-point packed params (lane-dense rows): (8, Np) = [s2, t2, b2, 0...]
    pp = jnp.stack([pad_v(params["s2"], n_pad), pad_v(params["t2"], n_pad),
                    pad_v(params["b2"], n_pad), zn, zn, zn, zn, zn], axis=0)

    kernel = functools.partial(oafilter_kernel, n_valid=N)
    sample_spec = pl.BlockSpec((None, c_pad, n_pad), lambda b: (b, 0, 0))

    out = pl.pallas_call(
        kernel,
        out_shape=jax.ShapeDtypeStruct((B, c_pad, n_pad), jnp.float32),
        grid_spec=pltpu.PrefetchScalarGridSpec(
            num_scalar_prefetch=0,
            grid=(B,),                              # one program per sample
            in_specs=[
                sample_spec,                        # x
                _invariant_spec((c_pad, c_pad)),    # w1 (bf16)
                _invariant_spec((n_pad, n_pad)),    # w2 (bf16)
                _invariant_spec((c_pad, c_pad)),    # w3 (bf16)
                _invariant_spec((c_pad, 8)),        # packed per-channel params
                _invariant_spec((8, n_pad)),        # packed per-point params
            ],
            out_specs=pl.BlockSpec((None, c_pad, n_pad), lambda b: (b, 0, 0)),
        ),
        compiler_params=pltpu.CompilerParams(
            # B>=2 keeps both v7x TensorCores busy; for B=1 a second parallel
            # axis (tiling N) would be needed to use the second core.
            dimension_semantics=("parallel",),
            vmem_limit_bytes=_vmem_limit_bytes(c_pad, n_pad)),
    )(x, w1, w2, w3, pc, pp)

    return out[:, :C, :N, None]                     # back to (B, C, N, 1)


def make_params(key, channels, points):
    """Deterministic synthetic parameters.

    Conv weights are stored in bf16 (MXU-native); eval-mode BN (fresh running
    stats mean=0, var=1) is folded into per-channel scale/shift (s*, t*).
    """
    C, N = channels, points
    ks = jax.random.split(key, 12)

    w1 = (jax.random.normal(ks[0], (C, C), jnp.float32) * 0.1).astype(jnp.bfloat16)
    b1 = jax.random.normal(ks[1], (C,), jnp.float32) * 0.1
    w2 = (jax.random.normal(ks[2], (N, N), jnp.float32) * 0.1).astype(jnp.bfloat16)
    b2 = jax.random.normal(ks[3], (N,), jnp.float32) * 0.1
    w3 = (jax.random.normal(ks[4], (C, C), jnp.float32) * 0.1).astype(jnp.bfloat16)
    b3 = jax.random.normal(ks[5], (C,), jnp.float32) * 0.1

    def bn_fold(kg, kb, dim):
        gamma = 1.0 + 0.1 * jax.random.normal(kg, (dim,), jnp.float32)
        beta = 0.1 * jax.random.normal(kb, (dim,), jnp.float32)
        running_mean = jnp.zeros((dim,), jnp.float32)
        running_var = jnp.ones((dim,), jnp.float32)
        scale = gamma * lax.rsqrt(running_var + EPS_BN)
        shift = beta - running_mean * scale
        return scale, shift

    s1, t1 = bn_fold(ks[6], ks[7], C)
    s2, t2 = bn_fold(ks[8], ks[9], N)
    s3, t3 = bn_fold(ks[10], ks[11], C)

    return dict(w1=w1, b1=b1, w2=w2, b2=b2, w3=w3, b3=b3,
                s1=s1, t1=t1, s2=s2, t2=t2, s3=s3, t3=t3)


def oafilter_reference(x_nchw, params):
    """Pure-JAX f32 reference mirroring the PyTorch forward (eval mode)."""
    x = x_nchw[..., 0].astype(jnp.float32)          # (B, C, N)
    w1 = params["w1"].astype(jnp.float32); b1 = params["b1"][:, None]
    w2 = params["w2"].astype(jnp.float32); b2 = params["b2"][:, None]
    w3 = params["w3"].astype(jnp.float32); b3 = params["b3"][:, None]
    s1 = params["s1"][:, None]; t1 = params["t1"][:, None]
    s2 = params["s2"][:, None]; t2 = params["t2"][:, None]
    s3 = params["s3"][:, None]; t3 = params["t3"][:, None]

    def inorm(v):                                   # normalize over points axis
        mu = v.mean(-1, keepdims=True)
        var = ((v - mu) ** 2).mean(-1, keepdims=True)
        return (v - mu) / jnp.sqrt(var + EPS_IN)

    y1 = jnp.maximum(s1 * inorm(x) + t1, 0.0)
    h1 = jnp.einsum("oc,bcn->bon", w1, y1) + b1     # conv1
    t = jnp.swapaxes(h1, 1, 2)                      # trans(1,2) -> (B, N, C)

    y2 = jnp.maximum(s2 * t + t2, 0.0)
    h2 = jnp.einsum("mn,bnc->bmc", w2, y2) + b2     # conv2
    t = t + h2

    u = jnp.swapaxes(t, 1, 2)                       # (B, C, N)
    y3 = jnp.maximum(s3 * inorm(u) + t3, 0.0)
    h3 = jnp.einsum("oc,bcn->bon", w3, y3) + b3     # conv3
    return (h3 + x)[..., None]


if __name__ == "__main__":
    # Small, deliberately unaligned shapes so the pad/mask path is exercised:
    # C=6 -> padded to 8 sublanes, N=100 -> padded to 128 lanes.
    B, channels, points = 2, 6, 100                 # x: (B, channels, points, 1)
    key = jax.random.PRNGKey(0)
    kx, kp = jax.random.split(key)
    x = jax.random.normal(kx, (B, channels, points, 1), jnp.float32)
    params = make_params(kp, channels, points)

    out = jax.block_until_ready(oafilter_forward(x, params))
    ref = oafilter_reference(x, params)

    # bf16 MXU operands with f32 accumulation -> relaxed tolerance vs f32 ref.
    np.testing.assert_allclose(np.asarray(out), np.asarray(ref),
                               rtol=3e-2, atol=3e-2)
    assert out.shape == (B, channels, points, 1)
    print("KERNEL_OK")
</pallas_src>

<mosaic_0001>
module attributes {stable_mosaic.version = 11 : i64} {
  func.func @oafilter_kernel(%arg0: i32, %arg1: memref<1x8x128xf32, #tpu.memory_space<vmem>>, %arg2: memref<8x8xbf16, #tpu.memory_space<vmem>>, %arg3: memref<128x128xbf16, #tpu.memory_space<vmem>>, %arg4: memref<8x8xbf16, #tpu.memory_space<vmem>>, %arg5: memref<8x8xf32, #tpu.memory_space<vmem>>, %arg6: memref<8x128xf32, #tpu.memory_space<vmem>>, %arg7: memref<1x8x128xf32, #tpu.memory_space<vmem>>) attributes {dimension_semantics = [#tpu.dimension_semantics<parallel>], iteration_bounds = array<i64: 2>, scalar_prefetch = 0 : i64, scratch_operands = 0 : i64, tpu.core_type = #tpu.core_type<tc>, window_params = [{transform_indices = @transform_0, window_bounds = array<i64: 1, 8, 128>}, {pipeline_mode = #tpu.pipeline_mode<synchronous>, transform_indices = @transform_1, window_bounds = array<i64: 8, 8>}, {pipeline_mode = #tpu.pipeline_mode<synchronous>, transform_indices = @transform_2, window_bounds = array<i64: 128, 128>}, {pipeline_mode = #tpu.pipeline_mode<synchronous>, transform_indices = @transform_3, window_bounds = array<i64: 8, 8>}, {pipeline_mode = #tpu.pipeline_mode<synchronous>, transform_indices = @transform_4, window_bounds = array<i64: 8, 8>}, {pipeline_mode = #tpu.pipeline_mode<synchronous>, transform_indices = @transform_5, window_bounds = array<i64: 8, 128>}, {transform_indices = @transform_6, window_bounds = array<i64: 1, 8, 128>}]} {
    %c0 = arith.constant 0 : index
    %c0_0 = arith.constant 0 : index
    %c0_1 = arith.constant 0 : index
    %0 = vector.load %arg1[%c0, %c0_0, %c0_1] : memref<1x8x128xf32, #tpu.memory_space<vmem>>, vector<1x8x128xf32>
    %1 = vector.shape_cast %0 : vector<1x8x128xf32> to vector<8x128xf32>
    %c0_2 = arith.constant 0 : index
    %c0_3 = arith.constant 0 : index
    %2 = vector.load %arg5[%c0_2, %c0_3] : memref<8x8xf32, #tpu.memory_space<vmem>>, vector<8x8xf32>
    %3 = vector.extract_strided_slice %2 {offsets = [0, 0], sizes = [8, 1], strides = [1, 1]} : vector<8x8xf32> to vector<8x1xf32>
    %4 = vector.extract_strided_slice %2 {offsets = [0, 1], sizes = [8, 1], strides = [1, 1]} : vector<8x8xf32> to vector<8x1xf32>
    %5 = vector.extract_strided_slice %2 {offsets = [0, 2], sizes = [8, 1], strides = [1, 1]} : vector<8x8xf32> to vector<8x1xf32>
    %6 = vector.extract_strided_slice %2 {offsets = [0, 3], sizes = [8, 1], strides = [1, 1]} : vector<8x8xf32> to vector<8x1xf32>
    %7 = vector.extract_strided_slice %2 {offsets = [0, 4], sizes = [8, 1], strides = [1, 1]} : vector<8x8xf32> to vector<8x1xf32>
    %8 = vector.extract_strided_slice %2 {offsets = [0, 5], sizes = [8, 1], strides = [1, 1]} : vector<8x8xf32> to vector<8x1xf32>
    %c0_4 = arith.constant 0 : index
    %c0_5 = arith.constant 0 : index
    %9 = vector.load %arg6[%c0_4, %c0_5] : memref<8x128xf32, #tpu.memory_space<vmem>>, vector<8x128xf32>
    %10 = vector.extract_strided_slice %9 {offsets = [0, 0], sizes = [1, 128], strides = [1, 1]} : vector<8x128xf32> to vector<1x128xf32>
    %11 = vector.extract_strided_slice %9 {offsets = [1, 0], sizes = [1, 128], strides = [1, 1]} : vector<8x128xf32> to vector<1x128xf32>
    %12 = vector.extract_strided_slice %9 {offsets = [2, 0], sizes = [1, 128], strides = [1, 1]} : vector<8x128xf32> to vector<1x128xf32>
    %cst = arith.constant dense<0.000000e+00> : vector<8xf32>
    %13 = vector.multi_reduction <add>, %1, %cst [1] : vector<8x128xf32> to vector<8xf32>
    %14 = vector.shape_cast %13 : vector<8xf32> to vector<8x1xf32>
    %15 = arith.mulf %1, %1 : vector<8x128xf32>
    %cst_6 = arith.constant dense<0.000000e+00> : vector<8xf32>
    %16 = vector.multi_reduction <add>, %15, %cst_6 [1] : vector<8x128xf32> to vector<8xf32>
    %17 = vector.shape_cast %16 : vector<8xf32> to vector<8x1xf32>
    %cst_7 = arith.constant 0.00999999977 : f32
    %18 = vector.broadcast %cst_7 : f32 to vector<8x1xf32>
    %19 = arith.mulf %14, %18 : vector<8x1xf32>
    %cst_8 = arith.constant 0.00999999977 : f32
    %20 = vector.broadcast %cst_8 : f32 to vector<8x1xf32>
    %21 = arith.mulf %17, %20 : vector<8x1xf32>
    %22 = arith.mulf %19, %19 : vector<8x1xf32>
    %23 = arith.subf %21, %22 : vector<8x1xf32>
    %cst_9 = arith.constant 0.000000e+00 : f32
    %24 = vector.broadcast %cst_9 : f32 to vector<8x1xf32>
    %25 = arith.maximumf %23, %24 : vector<8x1xf32>
    %cst_10 = arith.constant 1.000000e-03 : f32
    %26 = vector.broadcast %cst_10 : f32 to vector<8x1xf32>
    %27 = arith.addf %25, %26 : vector<8x1xf32>
    %28 = math.rsqrt %27 : vector<8x1xf32>
    %29 = arith.mulf %4, %28 : vector<8x1xf32>
    %30 = arith.mulf %29, %19 : vector<8x1xf32>
    %31 = arith.subf %5, %30 : vector<8x1xf32>
    %32 = vector.broadcast %29 : vector<8x1xf32> to vector<8x128xf32>
    %33 = arith.mulf %32, %1 : vector<8x128xf32>
    %34 = vector.broadcast %31 : vector<8x1xf32> to vector<8x128xf32>
    %35 = arith.addf %33, %34 : vector<8x128xf32>
    %cst_11 = arith.constant 0.000000e+00 : f32
    %36 = vector.broadcast %cst_11 : f32 to vector<8x128xf32>
    %37 = arith.maximumf %35, %36 : vector<8x128xf32>
    %c0_12 = arith.constant 0 : index
    %c0_13 = arith.constant 0 : index
    %38 = vector.load %arg2[%c0_12, %c0_13] : memref<8x8xbf16, #tpu.memory_space<vmem>>, vector<8x8xbf16>
    %39 = arith.truncf %37 : vector<8x128xf32> to vector<8x128xbf16>
    %cst_14 = arith.constant dense<0.000000e+00> : vector<8x128xf32>
    %40 = tpu.matmul %38, %39, %cst_14 {dimension_numbers = #tpu.dot_dimension_numbers<[1], [0], [0], [1], [0, 0, 1, 1], [], []>} : vector<8x8xbf16>, vector<8x128xbf16>, vector<8x128xf32> -> vector<8x128xf32>
    %41 = vector.broadcast %3 : vector<8x1xf32> to vector<8x128xf32>
    %42 = arith.addf %40, %41 : vector<8x128xf32>
    %43 = vector.broadcast %10 : vector<1x128xf32> to vector<8x128xf32>
    %44 = arith.mulf %43, %42 : vector<8x128xf32>
    %45 = vector.broadcast %11 : vector<1x128xf32> to vector<8x128xf32>
    %46 = arith.addf %44, %45 : vector<8x128xf32>
    %cst_15 = arith.constant 0.000000e+00 : f32
    %47 = vector.broadcast %cst_15 : f32 to vector<8x128xf32>
    %48 = arith.maximumf %46, %47 : vector<8x128xf32>
    %49 = arith.truncf %48 : vector<8x128xf32> to vector<8x128xbf16>
    %c0_16 = arith.constant 0 : index
    %c0_17 = arith.constant 0 : index
    %50 = vector.load %arg3[%c0_16, %c0_17] : memref<128x128xbf16, #tpu.memory_space<vmem>>, vector<128x128xbf16>
    %cst_18 = arith.constant dense<0.000000e+00> : vector<8x128xf32>
    %51 = tpu.matmul %49, %50, %cst_18 {dimension_numbers = #tpu.dot_dimension_numbers<[1], [1], [0], [0], [0, 0, 1, 0], [], []>} : vector<8x128xbf16>, vector<128x128xbf16>, vector<8x128xf32> -> vector<8x128xf32>
    %52 = vector.broadcast %12 : vector<1x128xf32> to vector<8x128xf32>
    %53 = arith.addf %51, %52 : vector<8x128xf32>
    %54 = arith.addf %42, %53 : vector<8x128xf32>
    %55 = tpu.iota {dimensions = array<i32: 1>} : vector<1x128xi32>
    %c100_i32 = arith.constant 100 : i32
    %56 = vector.broadcast %c100_i32 : i32 to vector<1x128xi32>
    %57 = arith.cmpi slt, %55, %56 : vector<1x128xi32>
    %cst_19 = arith.constant 0.000000e+00 : f32
    %58 = vector.shape_cast %57 : vector<1x128xi1> to vector<1x128xi1>
    %59 = vector.broadcast %58 : vector<1x128xi1> to vector<8x128xi1>
    %60 = vector.broadcast %cst_19 : f32 to vector<8x128xf32>
    %61 = arith.select %59, %54, %60 : vector<8x128xi1>, vector<8x128xf32>
    %cst_20 = arith.constant dense<0.000000e+00> : vector<8xf32>
    %62 = vector.multi_reduction <add>, %61, %cst_20 [1] : vector<8x128xf32> to vector<8xf32>
    %63 = vector.shape_cast %62 : vector<8xf32> to vector<8x1xf32>
    %64 = arith.mulf %61, %61 : vector<8x128xf32>
    %cst_21 = arith.constant dense<0.000000e+00> : vector<8xf32>
    %65 = vector.multi_reduction <add>, %64, %cst_21 [1] : vector<8x128xf32> to vector<8xf32>
    %66 = vector.shape_cast %65 : vector<8xf32> to vector<8x1xf32>
    %cst_22 = arith.constant 0.00999999977 : f32
    %67 = vector.broadcast %cst_22 : f32 to vector<8x1xf32>
    %68 = arith.mulf %63, %67 : vector<8x1xf32>
    %cst_23 = arith.constant 0.00999999977 : f32
    %69 = vector.broadcast %cst_23 : f32 to vector<8x1xf32>
    %70 = arith.mulf %66, %69 : vector<8x1xf32>
    %71 = arith.mulf %68, %68 : vector<8x1xf32>
    %72 = arith.subf %70, %71 : vector<8x1xf32>
    %cst_24 = arith.constant 0.000000e+00 : f32
    %73 = vector.broadcast %cst_24 : f32 to vector<8x1xf32>
    %74 = arith.maximumf %72, %73 : vector<8x1xf32>
    %cst_25 = arith.constant 1.000000e-03 : f32
    %75 = vector.broadcast %cst_25 : f32 to vector<8x1xf32>
    %76 = arith.addf %74, %75 : vector<8x1xf32>
    %77 = math.rsqrt %76 : vector<8x1xf32>
    %78 = arith.mulf %7, %77 : vector<8x1xf32>
    %79 = arith.mulf %78, %68 : vector<8x1xf32>
    %80 = arith.subf %8, %79 : vector<8x1xf32>
    %81 = vector.broadcast %78 : vector<8x1xf32> to vector<8x128xf32>
    %82 = arith.mulf %81, %61 : vector<8x128xf32>
    %83 = vector.broadcast %80 : vector<8x1xf32> to vector<8x128xf32>
    %84 = arith.addf %82, %83 : vector<8x128xf32>
    %cst_26 = arith.constant 0.000000e+00 : f32
    %85 = vector.broadcast %cst_26 : f32 to vector<8x128xf32>
    %86 = arith.maximumf %84, %85 : vector<8x128xf32>
    %c0_27 = arith.constant 0 : index
    %c0_28 = arith.constant 0 : index
    %87 = vector.load %arg4[%c0_27, %c0_28] : memref<8x8xbf16, #tpu.memory_space<vmem>>, vector<8x8xbf16>
    %88 = arith.truncf %86 : vector<8x128xf32> to vector<8x128xbf16>
    %cst_29 = arith.constant dense<0.000000e+00> : vector<8x128xf32>
    %89 = tpu.matmul %87, %88, %cst_29 {dimension_numbers = #tpu.dot_dimension_numbers<[1], [0], [0], [1], [0, 0, 1, 1], [], []>} : vector<8x8xbf16>, vector<8x128xbf16>, vector<8x128xf32> -> vector<8x128xf32>
    %90 = vector.broadcast %6 : vector<8x1xf32> to vector<8x128xf32>
    %91 = arith.addf %89, %90 : vector<8x128xf32>
    %92 = arith.addf %91, %1 : vector<8x128xf32>
    %c0_30 = arith.constant 0 : index
    %c0_31 = arith.constant 0 : index
    %c0_32 = arith.constant 0 : index
    %93 = vector.load %arg7[%c0_30, %c0_31, %c0_32] : memref<1x8x128xf32, #tpu.memory_space<vmem>>, vector<1x8x128xf32>
    %94 = vector.shape_cast %93 : vector<1x8x128xf32> to vector<8x128xf32>
    %95 = vector.shape_cast %92 : vector<8x128xf32> to vector<1x8x128xf32>
    tpu.vector_store %arg7[%c0_30, %c0_31, %c0_32], %95 {strides = array<i32>} : memref<1x8x128xf32, #tpu.memory_space<vmem>>, vector<1x8x128xf32>,
    return
  }
  func.func @transform_0(%arg0: i32) -> (i32, i32, i32) {
    %c0_i32 = arith.constant 0 : i32
    %c0_i32_0 = arith.constant 0 : i32
    %c0_i32_1 = arith.constant 0 : i32
    return %arg0, %c0_i32, %c0_i32_0 : i32, i32, i32
  }
  func.func @transform_1(%arg0: i32) -> (i32, i32) {
    %c0_i32 = arith.constant 0 : i32
    %c0_i32_0 = arith.constant 0 : i32
    %c0_i32_1 = arith.constant 0 : i32
    return %c0_i32, %c0_i32_0 : i32, i32
  }
  func.func @transform_2(%arg0: i32) -> (i32, i32) {
    %c0_i32 = arith.constant 0 : i32
    %c0_i32_0 = arith.constant 0 : i32
    %c0_i32_1 = arith.constant 0 : i32
    return %c0_i32, %c0_i32_0 : i32, i32
  }
  func.func @transform_3(%arg0: i32) -> (i32, i32) {
    %c0_i32 = arith.constant 0 : i32
    %c0_i32_0 = arith.constant 0 : i32
    %c0_i32_1 = arith.constant 0 : i32
    return %c0_i32, %c0_i32_0 : i32, i32
  }
  func.func @transform_4(%arg0: i32) -> (i32, i32) {
    %c0_i32 = arith.constant 0 : i32
    %c0_i32_0 = arith.constant 0 : i32
    %c0_i32_1 = arith.constant 0 : i32
    return %c0_i32, %c0_i32_0 : i32, i32
  }
  func.func @transform_5(%arg0: i32) -> (i32, i32) {
    %c0_i32 = arith.constant 0 : i32
    %c0_i32_0 = arith.constant 0 : i32
    %c0_i32_1 = arith.constant 0 : i32
    return %c0_i32, %c0_i32_0 : i32, i32
  }
  func.func @transform_6(%arg0: i32) -> (i32, i32, i32) {
    %c0_i32 = arith.constant 0 : i32
    %c0_i32_0 = arith.constant 0 : i32
    %c0_i32_1 = arith.constant 0 : i32
    return %arg0, %c0_i32, %c0_i32_0 : i32, i32, i32
  }
}

</mosaic_0001>

<llo_original>
// kernel: tpu_custom_call.1
$region0: #{tpu_custom_call.1}
  #allocation0 [shape = 'u32[]', space=smem, size = 0x4, offset = 0x4, fixed_abs, tag = 'smem constant byte address 0x4 - core index']
  #allocation1 [shape = 'u32[144,128]{1,0:T(1,128)}', space=vmem, size = 0x12000, scoped, tag = 'internal scratch']
  %s0 = inlined_call_operand.hbm [shape: f32[2,8,128], index: 0, kind: input, shape index: {}]
  %s1 = inlined_call_operand.hbm [shape: bf16[8,8], index: 1, kind: input, shape index: {}]
  %s2 = inlined_call_operand.hbm [shape: bf16[128,128], index: 2, kind: input, shape index: {}]
  %s3 = inlined_call_operand.hbm [shape: bf16[8,8], index: 3, kind: input, shape index: {}]
  %s4 = inlined_call_operand.vmem [shape: f32[8,8], index: 4, kind: input, shape index: {}]
  %s5 = inlined_call_operand.vmem [shape: f32[8,128], index: 5, kind: input, shape index: {}]
  %s6 = inlined_call_operand.hbm [shape: f32[2,8,128], index: 6, kind: output, shape index: {}]
  %s7 = sld [smem:[#allocation0]]
  $region73: #{tpu_custom_call.1} parent=0
    _
  %s9 = ssub.s32 1, %s7
  %s10 = scalar_select 0, %s9, %s7
  $region1: #{tpu_custom_call.1} parent=0
    #allocation2 [shape = 'u8[8192]{0}', space=vmem, size = 0x2000, scoped, tag = 'input window, operand 0']
    #allocation3 [shape = 's32[2]{0}', space=sflag, size = 0x8, scoped, tag = 'scoped memory for tpu_custom_call.1']
    #allocation4 [shape = 's32[2]{0}', space=sflag, size = 0x8, scoped, tag = 'scoped memory for tpu_custom_call.1']
    #allocation5 [shape = 'u8[2048]{0}', space=vmem, size = 0x800, scoped, tag = 'input window, operand 1, single buffered']
    #allocation6 [shape = 's32[1]{0}', space=sflag, size = 0x4, scoped, tag = 'scoped memory for tpu_custom_call.1']
    #allocation7 [shape = 'u8[32768]{0}', space=vmem, size = 0x8000, scoped, tag = 'input window, operand 2, single buffered']
    #allocation8 [shape = 'u8[2048]{0}', space=vmem, size = 0x800, scoped, tag = 'input window, operand 3, single buffered']
    #allocation9 [shape = 's32[1]{0}', space=sflag, size = 0x4, scoped, tag = 'scoped memory for tpu_custom_call.1']
    #allocation10 [shape = 'u8[8192]{0}', space=vmem, size = 0x2000, scoped, tag = 'output window, operand 0']
    %11 = vsyncpa [#allocation3], 0
    %s12 = scalar_lea.sflag [#allocation3], 1
    %13 = vsyncpa %s12, 0
    %14 = vsyncpa [#allocation6], 0
    %15 = vsyncpa [#allocation9], 0
    %16 = vsyncpa [#allocation4], 0
    %s17 = scalar_lea.sflag [#allocation4], 1
    %18 = vsyncpa %s17, 0
    loop: start=0, step=1, limit=4
    $region2: #{tpu_custom_call.1} parent=1 // loop_pre_header
      _
    $region3: #{tpu_custom_call.1} parent=1 // loop_header
      %s20 = sphi 0, %s24
      %p21 = scmp.ge.s32.totalorder %s20, 4
      %s30 = sphi 0, %s32
      %s33 = sphi 0, %s30
      %s34 = sphi 0, %s33
      %s50 = sphi 0, %s34
      %s54 = sphi 0, %s54
      %s56 = sphi 0, %s54
      %s57 = sphi 0, %s56
      %s71 = sphi 0, %s57
      %s75 = sphi 0, %s75
      %s77 = sphi 0, %s75
      %s78 = sphi 0, %s77
      %s92 = sphi 0, %s78
      %s96 = sphi 0, %s96
      %s98 = sphi 0, %s96
      %s99 = sphi 0, %s98
      %s113 = sphi 0, %s99
      %s117 = sphi 0, %s117
      %s119 = sphi 0, %s117
      %s120 = sphi 0, %s119
      %s134 = sphi 0, %s120
      %s138 = sphi 0, %s138
      %s140 = sphi 0, %s138
      %s141 = sphi 0, %s140
      %s155 = sphi 0, %s141
      %s161 = sphi 0, %s163
      %s164 = sphi 0, %s161
      %s165 = sphi 0, %s164
      %s181 = sphi 0, %s165
    $region4: #{tpu_custom_call.1} parent=1 // loop_header_branch
      %23 = sbr.rel (%p21) target = $region8
    $region5: #{tpu_custom_call.1} parent=1 // loop_body
      %s25 = ssub.s32 %s20, 1
      %s26 = ssub.s32 %s20, 2
      %s27 = sadd.s32 %s20, 1
      %s28 = ssub.s32 %s20, %s27
      %p29 = scmp.eq.s32.totalorder %s28, 0
      %s31 = sadd.s32 %s30, 1
      %s32 = scalar_select %p29, %s30, %s31
      %p35 = pneg %p29
      %p36 = scmp.eq.s32.totalorder %s20, 1
      %p37 = por %p35, %p36
      %p38 = scmp.ne.s32.totalorder %s30, %s33
      %p39 = scmp.eq.s32.totalorder %s20, 0
      %p40 = por %p38, %p39
      %p41 = scmp.ne.s32.totalorder %s30, %s33
      %p42 = scmp.eq.s32.totalorder %s25, 1
      %p43 = por %p41, %p42
      %p44 = scmp.ne.s32.totalorder %s33, %s34
      %p45 = scmp.eq.s32.totalorder %s25, 0
      %p46 = por %p44, %p45
      %p47 = scmp.ne.s32.totalorder %s33, %s34
      %p48 = scmp.eq.s32.totalorder %s26, 1
      %p49 = por %p47, %p48
      %p51 = scmp.ne.s32.totalorder %s34, %s50
      %p52 = scmp.eq.s32.totalorder %s26, 0
      %p53 = por %p51, %p52
      %s55 = sadd.s32 %s54, 1
      %p58 = scmp.eq.s32.totalorder %s20, 1
      %p59 = scmp.ne.s32.totalorder %s54, %s56
      %p60 = scmp.eq.s32.totalorder %s20, 0
      %p61 = por %p59, %p60
      %p62 = scmp.ne.s32.totalorder %s54, %s56
      %p63 = scmp.eq.s32.totalorder %s25, 1
      %p64 = por %p62, %p63
      %p65 = scmp.ne.s32.totalorder %s56, %s57
      %p66 = scmp.eq.s32.totalorder %s25, 0
      %p67 = por %p65, %p66
      %p68 = scmp.ne.s32.totalorder %s56, %s57
      %p69 = scmp.eq.s32.totalorder %s26, 1
      %p70 = por %p68, %p69
      %p72 = scmp.ne.s32.totalorder %s57, %s71
      %p73 = scmp.eq.s32.totalorder %s26, 0
      %p74 = por %p72, %p73
      %s76 = sadd.s32 %s75, 1
      %p79 = scmp.eq.s32.totalorder %s20, 1
      %p80 = scmp.ne.s32.totalorder %s75, %s77
      %p81 = scmp.eq.s32.totalorder %s20, 0
      %p82 = por %p80, %p81
      %p83 = scmp.ne.s32.totalorder %s75, %s77
      %p84 = scmp.eq.s32.totalorder %s25, 1
      %p85 = por %p83, %p84
      %p86 = scmp.ne.s32.totalorder %s77, %s78
      %p87 = scmp.eq.s32.totalorder %s25, 0
      %p88 = por %p86, %p87
      %p89 = scmp.ne.s32.totalorder %s77, %s78
      %p90 = scmp.eq.s32.totalorder %s26, 1
      %p91 = por %p89, %p90
      %p93 = scmp.ne.s32.totalorder %s78, %s92
      %p94 = scmp.eq.s32.totalorder %s26, 0
      %p95 = por %p93, %p94
      %s97 = sadd.s32 %s96, 1
      %p100 = scmp.eq.s32.totalorder %s20, 1
      %p101 = scmp.ne.s32.totalorder %s96, %s98
      %p102 = scmp.eq.s32.totalorder %s20, 0
      %p103 = por %p101, %p102
      %p104 = scmp.ne.s32.totalorder %s96, %s98
      %p105 = scmp.eq.s32.totalorder %s25, 1
      %p106 = por %p104, %p105
      %p107 = scmp.ne.s32.totalorder %s98, %s99
      %p108 = scmp.eq.s32.totalorder %s25, 0
      %p109 = por %p107, %p108
      %p110 = scmp.ne.s32.totalorder %s98, %s99
      %p111 = scmp.eq.s32.totalorder %s26, 1
      %p112 = por %p110, %p111
      %p114 = scmp.ne.s32.totalorder %s99, %s113
      %p115 = scmp.eq.s32.totalorder %s26, 0
      %p116 = por %p114, %p115
      %s118 = sadd.s32 %s117, 1
      %p121 = scmp.eq.s32.totalorder %s20, 1
      %p122 = scmp.ne.s32.totalorder %s117, %s119
      %p123 = scmp.eq.s32.totalorder %s20, 0
      %p124 = por %p122, %p123
      %p125 = scmp.ne.s32.totalorder %s117, %s119
      %p126 = scmp.eq.s32.totalorder %s25, 1
      %p127 = por %p125, %p126
      %p128 = scmp.ne.s32.totalorder %s119, %s120
      %p129 = scmp.eq.s32.totalorder %s25, 0
      %p130 = por %p128, %p129
      %p131 = scmp.ne.s32.totalorder %s119, %s120
      %p132 = scmp.eq.s32.totalorder %s26, 1
      %p133 = por %p131, %p132
      %p135 = scmp.ne.s32.totalorder %s120, %s134
      %p136 = scmp.eq.s32.totalorder %s26, 0
      %p137 = por %p135, %p136
      %s139 = sadd.s32 %s138, 1
      %p142 = scmp.eq.s32.totalorder %s20, 1
      %p143 = scmp.ne.s32.totalorder %s138, %s140
      %p144 = scmp.eq.s32.totalorder %s20, 0
      %p145 = por %p143, %p144
      %p146 = scmp.ne.s32.totalorder %s138, %s140
      %p147 = scmp.eq.s32.totalorder %s25, 1
      %p148 = por %p146, %p147
      %p149 = scmp.ne.s32.totalorder %s140, %s141
      %p150 = scmp.eq.s32.totalorder %s25, 0
      %p151 = por %p149, %p150
      %p152 = scmp.ne.s32.totalorder %s140, %s141
      %p153 = scmp.eq.s32.totalorder %s26, 1
      %p154 = por %p152, %p153
      %p156 = scmp.ne.s32.totalorder %s141, %s155
      %p157 = scmp.eq.s32.totalorder %s26, 0
      %p158 = por %p156, %p157
      %s159 = ssub.s32 %s20, %s27
      %p160 = scmp.eq.s32.totalorder %s159, 0
      %s162 = sadd.s32 %s161, 1
      %s163 = scalar_select %p160, %s161, %s162
      %p166 = pneg %p160
      %p167 = scmp.eq.s32.totalorder %s20, 1
      %p168 = por %p166, %p167
      %p169 = scmp.ne.s32.totalorder %s161, %s164
      %p170 = scmp.eq.s32.totalorder %s20, 0
      %p171 = por %p169, %p170
      %p172 = scmp.ne.s32.totalorder %s161, %s164
      %p173 = scmp.eq.s32.totalorder %s25, 1
      %p174 = por %p172, %p173
      %p175 = scmp.ne.s32.totalorder %s164, %s165
      %p176 = scmp.eq.s32.totalorder %s25, 0
      %p177 = por %p175, %p176
      %p178 = scmp.ne.s32.totalorder %s164, %s165
      %p179 = scmp.eq.s32.totalorder %s26, 1
      %p180 = por %p178, %p179
      %p182 = scmp.ne.s32.totalorder %s165, %s181
      %p183 = scmp.eq.s32.totalorder %s26, 0
      %p184 = por %p182, %p183
      %p185 = scmp.le.s32.totalorder 1, %s20
      %p186 = scmp.lt.s32.totalorder %s20, 3
      %p187 = pnand %p185, %p186
      %p188 = pneg %p187
      // Predicated region
      $region9: #{tpu_custom_call.1} parent=5 // pred_check
        _
      $region10: #{tpu_custom_call.1} parent=5 // pred_check_branch
        %190 = sbr.rel (%p187) target = $region12
      $region11: #{tpu_custom_call.1} parent=5 // pred_region
        %s191 = ssub.s32 %s20, 1
        // Predicated region
        $region13: #{tpu_custom_call.1} parent=11 // pred_check
          %p192 = pneg %p67
        $region14: #{tpu_custom_call.1} parent=11 // pred_check_branch
          %194 = sbr.rel (%p192) target = $region16
        $region15: #{tpu_custom_call.1} parent=11 // pred_region
          %s196 = ssub.s32 64, 64
          %197 = vsyncadd [#allocation6], %s196
          %s199 = sshll.u32 [#allocation5], 4
          %s200 = int_to_ptr.vmem [resolvable:$true] %s199
          %202 = dma.hbm_to_vmem [thread:$0]  %s1, 64, %s200, [#allocation6]
        $region16: #{tpu_custom_call.1} parent=11 // pred_fallthru
          _
        // Predicated region
        $region17: #{tpu_custom_call.1} parent=11 // pred_check
          %p203 = pneg %p88
        $region18: #{tpu_custom_call.1} parent=11 // pred_check_branch
          %205 = sbr.rel (%p203) target = $region20
        $region19: #{tpu_custom_call.1} parent=11 // pred_region
          %s207 = ssub.s32 1024, 1024
          %208 = vsyncadd [#allocation6], %s207
          %s209 = sshll.u32 [#allocation7], 4
          %s210 = int_to_ptr.vmem [resolvable:$true] %s209
          %215 = dma.hbm_to_vmem [thread:$0]  %s2, 1024, %s210, [#allocation6], 64, 64, 4
        $region20: #{tpu_custom_call.1} parent=11 // pred_fallthru
          _
        // Predicated region
        $region21: #{tpu_custom_call.1} parent=11 // pred_check
          %p216 = pneg %p109
        $region22: #{tpu_custom_call.1} parent=11 // pred_check_branch
          %218 = sbr.rel (%p216) target = $region24
        $region23: #{tpu_custom_call.1} parent=11 // pred_region
          %s220 = ssub.s32 64, 64
          %221 = vsyncadd [#allocation9], %s220
          %s223 = sshll.u32 [#allocation8], 4
          %s224 = int_to_ptr.vmem [resolvable:$true] %s223
          %226 = dma.hbm_to_vmem [thread:$0]  %s3, 64, %s224, [#allocation9]
        $region24: #{tpu_custom_call.1} parent=11 // pred_fallthru
          _
        // Predicated region
        $region25: #{tpu_custom_call.1} parent=11 // pred_check
          %p227 = pneg %p130
        $region26: #{tpu_custom_call.1} parent=11 // pred_check_branch
          %229 = sbr.rel (%p227) target = $region28
        $region27: #{tpu_custom_call.1} parent=11 // pred_region
          _
        $region28: #{tpu_custom_call.1} parent=11 // pred_fallthru
          _
        // Predicated region
        $region29: #{tpu_custom_call.1} parent=11 // pred_check
          %p230 = pneg %p151
        $region30: #{tpu_custom_call.1} parent=11 // pred_check_branch
          %232 = sbr.rel (%p230) target = $region32
        $region31: #{tpu_custom_call.1} parent=11 // pred_region
          _
        $region32: #{tpu_custom_call.1} parent=11 // pred_fallthru
          _
      $region12: #{tpu_custom_call.1} parent=5 // pred_fallthru
        _
      %p233 = scmp.lt.s32.totalorder %s20, 2
      // Predicated region
      $region33: #{tpu_custom_call.1} parent=5 // pred_check
        %p234 = pneg %p233
      $region34: #{tpu_custom_call.1} parent=5 // pred_check_branch
        %236 = sbr.rel (%p234) target = $region36
      $region35: #{tpu_custom_call.1} parent=5 // pred_region
        // Predicated region
        $region37: #{tpu_custom_call.1} parent=35 // pred_check
          %p237 = pneg %p40
        $region38: #{tpu_custom_call.1} parent=35 // pred_check_branch
          %239 = sbr.rel (%p237) target = $region40
        $region39: #{tpu_custom_call.1} parent=35 // pred_region
          %s240 = sand.u32 %s30, 1
          %s241 = scalar_lea.sflag [#allocation3], %s240
          %s242 = sand.u32 %s30, 1
          %s243 = smul.addr %s242, 8
          %s244 = scalar_lea.vmem [#allocation2], %s243
          %s246 = ssub.s32 128, 128
          %247 = vsyncadd %s241, %s246
          %s248 = smul.addr %s20, 128
          %s249 = scalar_lea.hbm %s0, %s248
          %s251 = sshll.u32 %s244, 4
          %s252 = int_to_ptr.vmem [resolvable:$true] %s251
          %254 = dma.hbm_to_vmem [thread:$0]  %s249, 128, %s252, %s241
        $region40: #{tpu_custom_call.1} parent=35 // pred_fallthru
          _
      $region36: #{tpu_custom_call.1} parent=5 // pred_fallthru
        _
      %p255 = scmp.le.s32.totalorder 1, %s20
      %p256 = scmp.lt.s32.totalorder %s20, 3
      %p257 = pnand %p255, %p256
      %p258 = pneg %p257
      // Predicated region
      $region41: #{tpu_custom_call.1} parent=5 // pred_check
        _
      $region42: #{tpu_custom_call.1} parent=5 // pred_check_branch
        %260 = sbr.rel (%p257) target = $region44
      $region43: #{tpu_custom_call.1} parent=5 // pred_region
        %s261 = ssub.s32 %s20, 1
        %s262 = sand.u32 %s33, 1
        %s263 = scalar_lea.sflag [#allocation3], %s262
        %s264 = sand.u32 %s33, 1
        %s265 = smul.addr %s264, 8
        %s266 = scalar_lea.vmem [#allocation2], %s265
        // Predicated region
        $region45: #{tpu_custom_call.1} parent=43 // pred_check
          %p267 = pneg %p46
        $region46: #{tpu_custom_call.1} parent=43 // pred_check_branch
          %269 = sbr.rel (%p267) target = $region48
        $region47: #{tpu_custom_call.1} parent=43 // pred_region
          %270 = dma.done %s263, 128
        $region48: #{tpu_custom_call.1} parent=43 // pred_fallthru
          _
        // Predicated region
        $region49: #{tpu_custom_call.1} parent=43 // pred_check
          %p271 = pneg %p67
        $region50: #{tpu_custom_call.1} parent=43 // pred_check_branch
          %273 = sbr.rel (%p271) target = $region52
        $region51: #{tpu_custom_call.1} parent=43 // pred_region
          %274 = dma.done [#allocation6], 64
        $region52: #{tpu_custom_call.1} parent=43 // pred_fallthru
          _
        // Predicated region
        $region53: #{tpu_custom_call.1} parent=43 // pred_check
          %p275 = pneg %p88
        $region54: #{tpu_custom_call.1} parent=43 // pred_check_branch
          %277 = sbr.rel (%p275) target = $region56
        $region55: #{tpu_custom_call.1} parent=43 // pred_region
          %278 = dma.done [#allocation6], 1024
        $region56: #{tpu_custom_call.1} parent=43 // pred_fallthru
          _
        // Predicated region
        $region57: #{tpu_custom_call.1} parent=43 // pred_check
          %p279 = pneg %p109
        $region58: #{tpu_custom_call.1} parent=43 // pred_check_branch
          %281 = sbr.rel (%p279) target = $region60
        $region59: #{tpu_custom_call.1} parent=43 // pred_region
          %282 = dma.done [#allocation9], 64
        $region60: #{tpu_custom_call.1} parent=43 // pred_fallthru
          _
        %s283 = sand.u32 %s33, 1
        %s284 = scalar_lea.sflag [#allocation3], %s283
        %s285 = sand.u32 %s33, 1
        %s286 = smul.addr %s285, 8
        %s287 = scalar_lea.vmem [#allocation2], %s286
        %p288 = pneg %p46
        %p289 = pneg %p43
        %p290 = pneg %p67
        %p291 = pneg %p64
        %p292 = pneg %p88
        %p293 = pneg %p85
        %p294 = pneg %p109
        %p295 = pneg %p106
        %p296 = pneg %p130
        %p297 = pneg %p127
        %p298 = pneg %p151
        %p299 = pneg %p148
        %p300 = pneg %p177
        %p301 = pneg %p174
        %s302 = sand.u32 %s164, 1
        %s303 = scalar_lea.sflag [#allocation4], %s302
        %s304 = sand.u32 %s164, 1
        %s305 = smul.addr %s304, 8
        %s306 = scalar_lea.vmem [#allocation10], %s305
        %v308 = vld [vmem:[%s266] sm:$0xff]
        %v309 = vld [vmem:[%s4] sm:$0xff]
        %v310 = vld [vmem:[%s5] sm:$0xff]
        %311 = vadd.xlane.f32.xlu0 %v308
        %v312 = vpop.xlane.xlu0 %311
        %v313 = vmul.f32 %v308, %v308
        %314 = vadd.xlane.f32.xlu0 %v313
        %v315 = vpop.xlane.xlu0 %314
        %v316 = vmul.f32 %v312, 0.01
        %v317 = vmul.f32 %v315, 0.01
        %v318 = vmul.f32 %v316, %v316
        %v319 = vsub.f32 %v317, %v318
        %v320 = vmax.f32 %v319, 0.0
        %v321 = vadd.f32 %v320, 0.001
        %v322 = vrsqrt.pop %v321
        %v323 = vmul.f32 %v309, %v322
        %v324 = vmul.f32 %v323, %v316
        %326 = vrot.lane.b32.xlu0 %v324, 1
        %v327 = vpop.permute.xlu0 %326
        %v329 = vsub.f32 %v309, %v327
        %331 = vset.pattern.permute.xlu0 1
        %332 = vperm.xlu0 %331, %v323
        %v333 = vpop.permute.xlu0 %332
        %v335 = vmul.f32 %v333, %v308
        %337 = vset.pattern.permute.xlu0 2
        %338 = vperm.xlu0 %337, %v329
        %v339 = vpop.permute.xlu0 %338
        %v341 = vadd.f32 %v335, %v339
        %v342 = vmax.f32 %v341, 0.0
        %v343 = vld [vmem:[#allocation5] sm:$0xf]
        %v344 = vpack.c.bf16 %v342, %v342
        %346 = vset.pattern.permute.xlu0 0
        %347 = vperm.xlu0 %346, %v309
        %v348 = vpop.permute.xlu0 %347
        %vm350 = vcmask 64512
        %v352 = vsel %vm350, %v343, 0
        %vm354 = vcmask 1043456
        %v356 = vsel %vm354, %v344, 0
        %358 = vmatprep.subr.bf16.mxu0 0
        %359 = vmatpush1.bf16.msra.mxu0 %v356
        %360 = vmatprep.subr.bf16.mxu0 0
        %361 = vmatpush1.bf16.msra.mxu0 0
        %362 = vmatprep.subr.bf16.mxu0 0
        %363 = vmatpush1.bf16.msra.mxu0 0
        %364 = vmatprep.subr.bf16.mxu0 0
        %365 = vmatpush1.bf16.msra.mxu0 0
        %366 = vmatprep.subr.bf16.mxu0 0
        %367 = vmatpush1.bf16.msra.mxu0 0
        %368 = vmatprep.subr.bf16.mxu0 0
        %369 = vmatpush1.bf16.msra.mxu0 0
        %370 = vmatprep.subr.bf16.mxu0 0
        %371 = vmatpush1.bf16.msra.mxu0 0
        %372 = vmatprep.subr.bf16.mxu0 0
        %373 = vmatpush1.bf16.msra.mxu0 0
        %374 = vmatprep.subr.bf16.mxu0 0
        %375 = vmatpush1.bf16.msra.mxu0 0
        %376 = vmatprep.subr.bf16.mxu0 0
        %377 = vmatpush1.bf16.msra.mxu0 0
        %378 = vmatprep.subr.bf16.mxu0 0
        %379 = vmatpush1.bf16.msra.mxu0 0
        %380 = vmatprep.subr.bf16.mxu0 0
        %381 = vmatpush1.bf16.msra.mxu0 0
        %382 = vmatprep.subr.bf16.mxu0 0
        %383 = vmatpush1.bf16.msra.mxu0 0
        %384 = vmatprep.subr.bf16.mxu0 0
        %385 = vmatpush1.bf16.msra.mxu0 0
        %386 = vmatprep.subr.bf16.mxu0 0
        %387 = vmatpush1.bf16.msra.mxu0 0
        %388 = vmatprep.subr.bf16.mxu0 0
        %389 = vmatpush1.bf16.msra.mxu0 0
        %390 = vmatprep.mubr.bf16.mxu0 0
        %391 = vmatmul.mubr.bf16.gmra.mrb[0].mxu0 %v352
        %v392 = vpop.f32.mrb[0].mxu0
        %v393 = vadd.f32 %v348, %v392
        %v394 = vpop.f32.mrb[0].mxu0
        %v395 = vpop.f32.mrb[0].mxu0
        %v396 = vpop.f32.mrb[0].mxu0
        %397 = vdwg.mxu0
        %v398 = vlaneseq
        %v399 = vshrl.u32 %v398, 7
        %v400 = vsub.s32 0, %v399
        %v401 = vrot.slane %v310, %v400
        %v402 = vmul.f32 %v401, %v393
        %v403 = vlaneseq
        %v404 = vshrl.u32 %v403, 7
        %v405 = vsub.s32 1, %v404
        %v406 = vrot.slane %v310, %v405
        %v407 = vadd.f32 %v402, %v406
        %v408 = vmax.f32 %v407, 0.0
        %v409 = vpack.c.bf16 %v408, %v408
        %v410 = vld [vmem:[#allocation7] sm:$0xf]
        %v411 = vld [vmem:[#allocation7 + $0x4] sm:$0xf]
        %v412 = vld [vmem:[#allocation7 + $0x8] sm:$0xf]
        %v413 = vld [vmem:[#allocation7 + $0xc] sm:$0xf]
        %v414 = vld [vmem:[#allocation7 + $0x10] sm:$0xf]
        %v415 = vld [vmem:[#allocation7 + $0x14] sm:$0xf]
        %v416 = vld [vmem:[#allocation7 + $0x18] sm:$0xf]
        %v417 = vld [vmem:[#allocation7 + $0x1c] sm:$0xf]
        %v418 = vld [vmem:[#allocation7 + $0x20] sm:$0xf]
        %v419 = vld [vmem:[#allocation7 + $0x24] sm:$0xf]
        %v420 = vld [vmem:[#allocation7 + $0x28] sm:$0xf]
        %v421 = vld [vmem:[#allocation7 + $0x2c] sm:$0xf]
        %v422 = vld [vmem:[#allocation7 + $0x30] sm:$0xf]
        %v423 = vld [vmem:[#allocation7 + $0x34] sm:$0xf]
        %v424 = vld [vmem:[#allocation7 + $0x38] sm:$0xf]
        %v425 = vld [vmem:[#allocation7 + $0x3c] sm:$0xf]
        %v426 = vlaneseq
        %v427 = vshrl.u32 %v426, 7
        %v428 = vsub.s32 2, %v427
        %v429 = vrot.slane %v310, %v428
        %v446 = vunpack.c.l.b16 %v410
        %v447 = vunpack.c.l.b16 %v411
        %v448 = vunpack.c.l.b16 %v412
        %v449 = vunpack.c.l.b16 %v413
        %v450 = vunpack.c.l.b16 %v414
        %v451 = vunpack.c.l.b16 %v415
        %v452 = vunpack.c.l.b16 %v416
        %v453 = vunpack.c.l.b16 %v417
        %v454 = vunpack.c.l.b16 %v418
        %v455 = vunpack.c.l.b16 %v419
        %v456 = vunpack.c.l.b16 %v420
        %v457 = vunpack.c.l.b16 %v421
        %v458 = vunpack.c.l.b16 %v422
        %v459 = vunpack.c.l.b16 %v423
        %v460 = vunpack.c.l.b16 %v424
        %v461 = vunpack.c.l.b16 %v425
        %v462 = vpack.c.b16 %v447, %v446
        %v463 = vpack.c.b16 %v449, %v448
        %v464 = vpack.c.b16 %v451, %v450
        %v465 = vpack.c.b16 %v453, %v452
        %v466 = vpack.c.b16 %v455, %v454
        %v467 = vpack.c.b16 %v457, %v456
        %v468 = vpack.c.b16 %v459, %v458
        %v469 = vpack.c.b16 %v461, %v460
        %478 = vmatprep.subr.bf16.mxu0 0
        %479 = vmatpush1.bf16.xpose.msra.mxu0 %v462
        %480 = vmatprep.subr.bf16.mxu0 0
        %481 = vmatpush1.bf16.xpose.msra.mxu0 %v463
        %482 = vmatprep.subr.bf16.mxu0 0
        %483 = vmatpush1.bf16.xpose.msra.mxu0 %v464
        %484 = vmatprep.subr.bf16.mxu0 0
        %485 = vmatpush1.bf16.xpose.msra.mxu0 %v465
        %486 = vmatprep.subr.bf16.mxu0 0
        %487 = vmatpush1.bf16.xpose.msra.mxu0 %v466
        %488 = vmatprep.subr.bf16.mxu0 0
        %489 = vmatpush1.bf16.xpose.msra.mxu0 %v467
        %490 = vmatprep.subr.bf16.mxu0 0
        %491 = vmatpush1.bf16.xpose.msra.mxu0 %v468
        %492 = vmatprep.subr.bf16.mxu0 0
        %493 = vmatpush1.bf16.xpose.msra.mxu0 %v469
        %494 = vmatprep.subr.bf16.mxu0 0
        %495 = vmatpush1.bf16.xpose.msra.mxu0 0
        %496 = vmatprep.subr.bf16.mxu0 0
        %497 = vmatpush1.bf16.xpose.msra.mxu0 0
        %498 = vmatprep.subr.bf16.mxu0 0
        %499 = vmatpush1.bf16.xpose.msra.mxu0 0
        %500 = vmatprep.subr.bf16.mxu0 0
        %501 = vmatpush1.bf16.xpose.msra.mxu0 0
        %502 = vmatprep.subr.bf16.mxu0 0
        %503 = vmatpush1.bf16.xpose.msra.mxu0 0
        %504 = vmatprep.subr.bf16.mxu0 0
        %505 = vmatpush1.bf16.xpose.msra.mxu0 0
        %506 = vmatprep.subr.bf16.mxu0 0
        %507 = vmatpush1.bf16.xpose.msra.mxu0 0
        %508 = vmatprep.subr.bf16.mxu0 0
        %509 = vmatpush1.bf16.xpose.msra.mxu0 0
        %510 = vmatprep.mubr.bf16.mxu0 0
        %511 = vmatmul.mubr.bf16.gmra.mrb[0].mxu0 %v409
        %v512 = vpop.f32.mrb[0].mxu0
        %v513 = vadd.f32 %v429, %v512
        %v514 = vpop.f32.mrb[0].mxu0
        %v515 = vpop.f32.mrb[0].mxu0
        %v516 = vpop.f32.mrb[0].mxu0
        %517 = vdwg.mxu0
        %v518 = vadd.f32 %v393, %v513
        %v519 = vlaneseq
        %v520 = vand.u32 %v519, 127
        %vm521 = vcmp.lt.s32.totalorder %v520, 100
        %v522 = vsel %vm521, 1, 0
        %vm523 = vcmp.eq.s32.totalorder %v522, 1
        %v524 = vsel %vm523, %v518, 0.0
        %525 = vadd.xlane.f32.xlu0 %v524
        %v526 = vpop.xlane.xlu0 %525
        %v527 = vmul.f32 %v524, %v524
        %528 = vadd.xlane.f32.xlu0 %v527
        %v529 = vpop.xlane.xlu0 %528
        %v530 = vmul.f32 %v526, 0.01
        %v531 = vmul.f32 %v529, 0.01
        %v532 = vmul.f32 %v530, %v530
        %v533 = vsub.f32 %v531, %v532
        %v534 = vmax.f32 %v533, 0.0
        %v535 = vadd.f32 %v534, 0.001
        %v536 = vrsqrt.pop %v535
        %v537 = vmul.f32 %v309, %v536
        %v538 = vmul.f32 %v537, %v530
        %540 = vrot.lane.b32.xlu0 %v538, 1
        %v541 = vpop.permute.xlu0 %540
        %v543 = vsub.f32 %v309, %v541
        %545 = vset.pattern.permute.xlu0 4
        %546 = vperm.xlu0 %545, %v537
        %v547 = vpop.permute.xlu0 %546
        %v549 = vmul.f32 %v547, %v524
        %551 = vset.pattern.permute.xlu0 5
        %552 = vperm.xlu0 %551, %v543
        %v553 = vpop.permute.xlu0 %552
        %v555 = vadd.f32 %v549, %v553
        %v556 = vmax.f32 %v555, 0.0
        %v557 = vld [vmem:[#allocation8] sm:$0xf]
        %v558 = vpack.c.bf16 %v556, %v556
        %559 = vset.pattern.permute.xlu0 3
        %560 = vperm.xlu0 %559, %v309
        %v561 = vpop.permute.xlu0 %560
        %v564 = vsel %vm350, %v557, 0
        %v567 = vsel %vm354, %v558, 0
        %569 = vmatprep.subr.bf16.mxu0 0
        %570 = vmatpush1.bf16.msra.mxu0 %v567
        %571 = vmatprep.subr.bf16.mxu0 0
        %572 = vmatpush1.bf16.msra.mxu0 0
        %573 = vmatprep.subr.bf16.mxu0 0
        %574 = vmatpush1.bf16.msra.mxu0 0
        %575 = vmatprep.subr.bf16.mxu0 0
        %576 = vmatpush1.bf16.msra.mxu0 0
        %577 = vmatprep.subr.bf16.mxu0 0
        %578 = vmatpush1.bf16.msra.mxu0 0
        %579 = vmatprep.subr.bf16.mxu0 0
        %580 = vmatpush1.bf16.msra.mxu0 0
        %581 = vmatprep.subr.bf16.mxu0 0
        %582 = vmatpush1.bf16.msra.mxu0 0
        %583 = vmatprep.subr.bf16.mxu0 0
        %584 = vmatpush1.bf16.msra.mxu0 0
        %585 = vmatprep.subr.bf16.mxu0 0
        %586 = vmatpush1.bf16.msra.mxu0 0
        %587 = vmatprep.subr.bf16.mxu0 0
        %588 = vmatpush1.bf16.msra.mxu0 0
        %589 = vmatprep.subr.bf16.mxu0 0
        %590 = vmatpush1.bf16.msra.mxu0 0
        %591 = vmatprep.subr.bf16.mxu0 0
        %592 = vmatpush1.bf16.msra.mxu0 0
        %593 = vmatprep.subr.bf16.mxu0 0
        %594 = vmatpush1.bf16.msra.mxu0 0
        %595 = vmatprep.subr.bf16.mxu0 0
        %596 = vmatpush1.bf16.msra.mxu0 0
        %597 = vmatprep.subr.bf16.mxu0 0
        %598 = vmatpush1.bf16.msra.mxu0 0
        %599 = vmatprep.subr.bf16.mxu0 0
        %600 = vmatpush1.bf16.msra.mxu0 0
        %601 = vmatprep.mubr.bf16.mxu0 0
        %602 = vmatmul.mubr.bf16.gmra.mrb[0].mxu0 %v564
        %v603 = vpop.f32.mrb[0].mxu0
        %v604 = vadd.f32 %v561, %v603
        %v605 = vpop.f32.mrb[0].mxu0
        %v606 = vpop.f32.mrb[0].mxu0
        %v607 = vpop.f32.mrb[0].mxu0
        %608 = vdwg.mxu0
        %v609 = vadd.f32 %v604, %v308
        %610 = vst [vmem:[%s306] sm:$0xff] %v609
        %s611 = sand.u32 %s164, 1
        %s612 = scalar_lea.sflag [#allocation4], %s611
        %s613 = sand.u32 %s164, 1
        %s614 = smul.addr %s613, 8
        %s615 = scalar_lea.vmem [#allocation10], %s614
        // Predicated region
        $region61: #{tpu_custom_call.1} parent=43 // pred_check
          %p616 = pneg %p174
        $region62: #{tpu_custom_call.1} parent=43 // pred_check_branch
          %618 = sbr.rel (%p616) target = $region64
        $region63: #{tpu_custom_call.1} parent=43 // pred_region
          %s620 = ssub.s32 128, 128
          %621 = vsyncadd %s612, %s620
          %s622 = smul.addr %s25, 128
          %s623 = scalar_lea.hbm %s6, %s622
          %s625 = sshll.u32 %s615, 4
          %s626 = int_to_ptr.vmem [resolvable:$true] %s625
          %628 = dma.vmem_to_hbm [thread:$0]  %s626, 128, %s623, %s612
        $region64: #{tpu_custom_call.1} parent=43 // pred_fallthru
          _
      $region44: #{tpu_custom_call.1} parent=5 // pred_fallthru
        _
      %p629 = scmp.le.s32.totalorder 2, %s20
      // Predicated region
      $region65: #{tpu_custom_call.1} parent=5 // pred_check
        %p630 = pneg %p629
      $region66: #{tpu_custom_call.1} parent=5 // pred_check_branch
        %632 = sbr.rel (%p630) target = $region68
      $region67: #{tpu_custom_call.1} parent=5 // pred_region
        %s633 = ssub.s32 %s20, 2
        // Predicated region
        $region69: #{tpu_custom_call.1} parent=67 // pred_check
          %p634 = pneg %p180
        $region70: #{tpu_custom_call.1} parent=67 // pred_check_branch
          %636 = sbr.rel (%p634) target = $region72
        $region71: #{tpu_custom_call.1} parent=67 // pred_region
          %s637 = sand.u32 %s165, 1
          %s638 = scalar_lea.sflag [#allocation4], %s637
          %s639 = sand.u32 %s165, 1
          %s640 = smul.addr %s639, 8
          %s641 = scalar_lea.vmem [#allocation10], %s640
          %642 = dma.done %s638, 128
        $region72: #{tpu_custom_call.1} parent=67 // pred_fallthru
          _
      $region68: #{tpu_custom_call.1} parent=5 // pred_fallthru
        _
    $region6: #{tpu_custom_call.1} parent=1 // loop_footer
      %s24 = sadd.s32 1, %s20
    $region7: #{tpu_custom_call.1} parent=1 // loop_footer_branch
      %19 = sbr.rel target = $region3
    $region8: #{tpu_custom_call.1} parent=1 // loop_exit
      _
    %643 = vsyncpa [#allocation3], 1
    %s644 = scalar_lea.sflag [#allocation3], 1
    %645 = vsyncpa %s644, 1
    %646 = vsyncpa [#allocation6], 1
    %647 = vsyncpa [#allocation9], 1
    %648 = vsyncpa [#allocation4], 1
    %s649 = scalar_lea.sflag [#allocation4], 1
    %650 = vsyncpa %s649, 1

</llo_original>
